<compile_context>
chip_gen: v7x
topology: tpu7x:2x2x1
jax: 0.10.0
libtpu: 0.0.40
codegen_flags: <defaults>
</compile_context>

<pallas_src>
from functools import partial

import jax
import jax.numpy as jnp
from jax import lax
from jax.experimental import pallas as pl
from jax.experimental.pallas import tpu as pltpu

BN_EPS = 1e-5
_LANE = 128
_STATS_ROWS = 8        # sublane-aligned partial-stats block height


def _round_up(n, m):
    return ((n + m - 1) // m) * m


def _vmem_capacity_bytes():
    try:
        return int(pltpu.get_tpu_info().vmem_capacity_bytes)
    except Exception:
        return 64 << 20   # conservative fallback (v7x-sized)


_VMEM_BYTES = _vmem_capacity_bytes()
_BIG_VMEM = _VMEM_BYTES >= (100 << 20)          # v5e/v6e (128 MiB) vs v7x (64 MiB)
_FUSED_MAX_BATCH = 8192 if _BIG_VMEM else 4096  # whole-batch-resident fused path below this
_MAX_TILE_B = 2048 if _BIG_VMEM else 1024       # batch tile for the tiled path
_FUSED_VMEM_LIMIT = min(int(_VMEM_BYTES * 3 // 4), 96 << 20)


# --------------------------------------------------------------------------- #
# BN helpers
# --------------------------------------------------------------------------- #
def _bn_scale_shift(sum_, sumsq, gamma, beta, inv_n):
    """One FMA per element: y = h*scale + shift, from full-batch sum / sumsq."""
    mean = sum_ * inv_n
    var = jnp.maximum(sumsq * inv_n - mean * mean, 0.0)
    scale = gamma * lax.rsqrt(var + BN_EPS)          # EUP rsqrt (free slot)
    shift = beta - mean * scale
    return scale, shift


def _stats_block(row):
    """Place a (1, C) partial-stat row into a sublane-aligned (8, C) block."""
    c = row.shape[-1]
    return jnp.concatenate(
        [row, jnp.zeros((_STATS_ROWS - 1, c), row.dtype)], axis=0)


# --------------------------------------------------------------------------- #
# Path 1: small/medium batch -> single fused grid-less kernel (all in VMEM).
# --------------------------------------------------------------------------- #
def _fused_kernel(x_ref, ew1_ref, eg1_ref, ebe1_ref, ew2_ref, eb2_ref,
                  ew3_ref, eb3_ref, dw1_ref, dg1_ref, dbe1_ref,
                  dw2_ref, db2_ref, dw3_ref, db3_ref, z0_ref, z1_ref):
    f32, bf16 = jnp.float32, jnp.bfloat16
    inv_n = 1.0 / x_ref.shape[0]

    # ----- encoder -----
    h = jnp.dot(x_ref[...].astype(bf16), ew1_ref[...], preferred_element_type=f32)
    scale, shift = _bn_scale_shift(jnp.sum(h, axis=0, keepdims=True),
                                   jnp.sum(h * h, axis=0, keepdims=True),
                                   eg1_ref[...], ebe1_ref[...], inv_n)
    h = jnp.maximum(h * scale + shift, 0.0)
    h = jnp.maximum(jnp.dot(h.astype(bf16), ew2_ref[...],
                            preferred_element_type=f32) + eb2_ref[...], 0.0)
    z0 = jnp.tanh(jnp.dot(h.astype(bf16), ew3_ref[...],
                          preferred_element_type=f32) + eb3_ref[...])
    z0_ref[...] = z0.astype(z0_ref.dtype)

    # ----- decoder -----
    d = jnp.dot(z0.astype(bf16), dw1_ref[...], preferred_element_type=f32)
    scale, shift = _bn_scale_shift(jnp.sum(d, axis=0, keepdims=True),
                                   jnp.sum(d * d, axis=0, keepdims=True),
                                   dg1_ref[...], dbe1_ref[...], inv_n)
    d = jnp.maximum(d * scale + shift, 0.0)
    d = jnp.maximum(jnp.dot(d.astype(bf16), dw2_ref[...],
                            preferred_element_type=f32) + db2_ref[...], 0.0)
    z1 = jnp.dot(d.astype(bf16), dw3_ref[...], preferred_element_type=f32) + db3_ref[...]
    z1_ref[...] = z1.astype(z1_ref.dtype)


def _model_flops(B, N, HP, NP):
    dims = ((N, 256), (256, 128), (128, HP),        # encoder
            (HP, 128), (128, 256), (256, NP))       # decoder
    return sum(2 * B * k * n for k, n in dims)


def _forward_fused(x, pk):
    B, N = x.shape
    HP = pk["ew3"].shape[1]
    NP = pk["dw3"].shape[1]
    vmem = pl.BlockSpec(memory_space=pltpu.MemorySpace.VMEM)
    args = (x, pk["ew1"], pk["eg1"], pk["ebeta1"], pk["ew2"], pk["eb2"],
            pk["ew3"], pk["eb3"], pk["dw1"], pk["dg1"], pk["dbeta1"],
            pk["dw2"], pk["db2"], pk["dw3"], pk["db3"])
    w_bytes = sum(a.size * a.dtype.itemsize for a in args[1:])
    ce = pl.CostEstimate(
        flops=_model_flops(B, N, HP, NP),
        transcendentals=B * HP,
        bytes_accessed=B * (N + HP + NP) * 4 + w_bytes)
    z0p, z1p = pl.pallas_call(
        _fused_kernel,
        out_shape=(jax.ShapeDtypeStruct((B, HP), jnp.float32),
                   jax.ShapeDtypeStruct((B, NP), jnp.float32)),
        in_specs=[vmem] * len(args),
        out_specs=(vmem, vmem),
        compiler_params=pltpu.CompilerParams(vmem_limit_bytes=_FUSED_VMEM_LIMIT),
        cost_estimate=ce,
    )(*args)
    return z0p, z1p


# --------------------------------------------------------------------------- #
# Path 2: large batch -> batch-tiled, 3-stage pipeline with exact full-batch BN.
#   stage 1: partial sum/sumsq of h1 = x @ eW1          (stats only, parallel)
#   wrapper: reduce encoder-BN stats
#   stage 2: recompute h1, BN -> encoder -> z0 ; partial stats of d1 = z0 @ dW1
#   wrapper: reduce decoder-BN stats
#   stage 3: recompute d1 from z0, BN -> decoder -> z1  (parallel)
# --------------------------------------------------------------------------- #
def _stage1_kernel(x_ref, ew1_ref, esum_ref, esq_ref):
    h = jnp.dot(x_ref[...].astype(jnp.bfloat16), ew1_ref[...],
                preferred_element_type=jnp.float32)
    esum_ref[...] = _stats_block(jnp.sum(h, axis=0, keepdims=True))
    esq_ref[...] = _stats_block(jnp.sum(h * h, axis=0, keepdims=True))


def _stage2_kernel(inv_n, x_ref, ew1_ref, esum_ref, esq_ref, eg1_ref, ebe1_ref,
                   ew2_ref, eb2_ref, ew3_ref, eb3_ref, dw1_ref,
                   z0_ref, dsum_ref, dsq_ref):
    f32, bf16 = jnp.float32, jnp.bfloat16

    h = jnp.dot(x_ref[...].astype(bf16), ew1_ref[...], preferred_element_type=f32)
    scale, shift = _bn_scale_shift(esum_ref[...], esq_ref[...],
                                   eg1_ref[...], ebe1_ref[...], inv_n)
    h = jnp.maximum(h * scale + shift, 0.0)
    h = jnp.maximum(jnp.dot(h.astype(bf16), ew2_ref[...],
                            preferred_element_type=f32) + eb2_ref[...], 0.0)
    z0 = jnp.tanh(jnp.dot(h.astype(bf16), ew3_ref[...],
                          preferred_element_type=f32) + eb3_ref[...])
    z0_ref[...] = z0.astype(z0_ref.dtype)

    d1 = jnp.dot(z0.astype(bf16), dw1_ref[...], preferred_element_type=f32)
    dsum_ref[...] = _stats_block(jnp.sum(d1, axis=0, keepdims=True))
    dsq_ref[...] = _stats_block(jnp.sum(d1 * d1, axis=0, keepdims=True))


def _stage3_kernel(inv_n, z0_ref, dw1_ref, dsum_ref, dsq_ref, dg1_ref, dbe1_ref,
                   dw2_ref, db2_ref, dw3_ref, db3_ref, z1_ref):
    f32, bf16 = jnp.float32, jnp.bfloat16

    d1 = jnp.dot(z0_ref[...].astype(bf16), dw1_ref[...], preferred_element_type=f32)
    scale, shift = _bn_scale_shift(dsum_ref[...], dsq_ref[...],
                                   dg1_ref[...], dbe1_ref[...], inv_n)
    d = jnp.maximum(d1 * scale + shift, 0.0)
    d = jnp.maximum(jnp.dot(d.astype(bf16), dw2_ref[...],
                            preferred_element_type=f32) + db2_ref[...], 0.0)
    z1 = jnp.dot(d.astype(bf16), dw3_ref[...], preferred_element_type=f32) + db3_ref[...]
    z1_ref[...] = z1.astype(z1_ref.dtype)


def _forward_tiled(x, pk, tile_b):
    B, N = x.shape
    HP = pk["ew3"].shape[1]
    NP = pk["dw3"].shape[1]
    T = B // tile_b
    inv_n = 1.0 / B            # full-batch count, baked in at trace time
    par = pltpu.CompilerParams(dimension_semantics=("parallel",))

    x_spec = pl.BlockSpec((tile_b, N), lambda i: (i, 0))

    def resident(arr):         # VMEM-resident across all tiles (constant block index)
        return pl.BlockSpec(arr.shape, lambda i: (0, 0))

    def stats_spec(c):         # per-tile partial-stats row block (sublane aligned)
        return pl.BlockSpec((_STATS_ROWS, c), lambda i: (i, 0))

    def stats_shape(c):
        return jax.ShapeDtypeStruct((T * _STATS_ROWS, c), jnp.float32)

    w_bytes = lambda names: sum(pk[n].size * pk[n].dtype.itemsize for n in names)

    # ---- stage 1: encoder-BN partial statistics only (no activation writeback) ----
    esum_p, esq_p = pl.pallas_call(
        _stage1_kernel,
        grid=(T,),
        out_shape=(stats_shape(256), stats_shape(256)),
        in_specs=[x_spec, resident(pk["ew1"])],
        out_specs=(stats_spec(256), stats_spec(256)),
        compiler_params=par,
        cost_estimate=pl.CostEstimate(
            flops=2 * B * N * 256, transcendentals=0,
            bytes_accessed=B * N * 4 + w_bytes(("ew1",)) + 2 * T * _STATS_ROWS * 256 * 4),
    )(x, pk["ew1"])
    esum = jnp.sum(esum_p, axis=0, keepdims=True)
    esq = jnp.sum(esq_p, axis=0, keepdims=True)

    # ---- stage 2: recompute h1, encoder tail -> z0 ; decoder-BN partial stats ----
    s2_in = (x, pk["ew1"], esum, esq, pk["eg1"], pk["ebeta1"], pk["ew2"], pk["eb2"],
             pk["ew3"], pk["eb3"], pk["dw1"])
    z0p, dsum_p, dsq_p = pl.pallas_call(
        partial(_stage2_kernel, inv_n),
        grid=(T,),
        out_shape=(jax.ShapeDtypeStruct((B, HP), jnp.float32),
                   stats_shape(128), stats_shape(128)),
        in_specs=[x_spec] + [resident(a) for a in s2_in[1:]],
        out_specs=(pl.BlockSpec((tile_b, HP), lambda i: (i, 0)),
                   stats_spec(128), stats_spec(128)),
        compiler_params=par,
        cost_estimate=pl.CostEstimate(
            flops=2 * B * (N * 256 + 256 * 128 + 128 * HP + HP * 128),
            transcendentals=B * HP,
            bytes_accessed=B * (N + HP) * 4
            + w_bytes(("ew1", "ew2", "ew3", "dw1")) + 2 * T * _STATS_ROWS * 128 * 4),
    )(*s2_in)
    dsum = jnp.sum(dsum_p, axis=0, keepdims=True)
    dsq = jnp.sum(dsq_p, axis=0, keepdims=True)

    # ---- stage 3: recompute d1 from z0, decoder tail -> z1 ----
    s3_in = (z0p, pk["dw1"], dsum, dsq, pk["dg1"], pk["dbeta1"], pk["dw2"], pk["db2"],
             pk["dw3"], pk["db3"])
    z1p = pl.pallas_call(
        partial(_stage3_kernel, inv_n),
        grid=(T,),
        out_shape=jax.ShapeDtypeStruct((B, NP), jnp.float32),
        in_specs=[pl.BlockSpec((tile_b, HP), lambda i: (i, 0))]
        + [resident(a) for a in s3_in[1:]],
        out_specs=pl.BlockSpec((tile_b, NP), lambda i: (i, 0)),
        compiler_params=par,
        cost_estimate=pl.CostEstimate(
            flops=2 * B * (HP * 128 + 128 * 256 + 256 * NP),
            transcendentals=0,
            bytes_accessed=B * (HP + NP) * 4 + w_bytes(("dw1", "dw2", "dw3"))),
    )(*s3_in)

    return z0p, z1p


# --------------------------------------------------------------------------- #
# Parameter construction / packing
# --------------------------------------------------------------------------- #
def init_params(key, nail_size, hammer_size):
    """PyTorch-like init. Linear weights stored transposed as [in, out]; biases and
    BN params as [1, out]. eb1/db1 exist in the reference but are mathematically dead
    under training-mode BN, so the kernels drop them."""
    ks = jax.random.split(key, 6)

    def lin(k, fan_in, fan_out):
        kw, kb = jax.random.split(k)
        bound = 1.0 / jnp.sqrt(fan_in)
        w = jax.random.uniform(kw, (fan_in, fan_out), jnp.float32, -bound, bound)
        b = jax.random.uniform(kb, (1, fan_out), jnp.float32, -bound, bound)
        return w, b

    ew1, eb1 = lin(ks[0], nail_size, 256)
    eg1 = jnp.ones((1, 256), jnp.float32)
    ebeta1 = jnp.zeros((1, 256), jnp.float32)
    ew2, eb2 = lin(ks[1], 256, 128)
    ew3, eb3 = lin(ks[2], 128, hammer_size)
    dw1, db1 = lin(ks[3], hammer_size, 128)
    dg1 = jnp.ones((1, 128), jnp.float32)
    dbeta1 = jnp.zeros((1, 128), jnp.float32)
    dw2, db2 = lin(ks[4], 128, 256)
    dw3, db3 = lin(ks[5], 256, nail_size)

    return (ew1, eb1, eg1, ebeta1, ew2, eb2, ew3, eb3,
            dw1, db1, dg1, dbeta1, dw2, db2, dw3, db3)


def pack_params(params, nail_size, hammer_size):
    """Zero-pad narrow OUTPUT dims to 128 lanes (lane-dense stores) and pre-cast
    weight matrices to bf16 (MXU-native). Biases / BN params stay f32.
    x / ew1 are left unpadded (K=nail_size matmul; no wrapper-side x copy)."""
    (ew1, eb1, eg1, ebeta1, ew2, eb2, ew3, eb3,
     dw1, db1, dg1, dbeta1, dw2, db2, dw3, db3) = params
    NP = _round_up(nail_size, _LANE)
    HP = _round_up(hammer_size, _LANE)

    def pad_rows(w, rows):
        return jnp.pad(w, ((0, rows - w.shape[0]), (0, 0)))

    def pad_cols(w, cols):
        return jnp.pad(w, ((0, 0), (0, cols - w.shape[1])))

    return dict(
        ew1=ew1.astype(jnp.bfloat16),
        eg1=eg1, ebeta1=ebeta1,
        ew2=ew2.astype(jnp.bfloat16), eb2=eb2,
        ew3=pad_cols(ew3, HP).astype(jnp.bfloat16), eb3=pad_cols(eb3, HP),
        dw1=pad_rows(dw1, HP).astype(jnp.bfloat16),   # padded z0 cols are exactly 0
        dg1=dg1, dbeta1=dbeta1,
        dw2=dw2.astype(jnp.bfloat16), db2=db2,
        dw3=pad_cols(dw3, NP).astype(jnp.bfloat16), db3=pad_cols(db3, NP),
    )


def _pick_tile_b(B):
    for t in (2048, 1024, 512, 256, 128, 64, 32, 16, 8):
        if t <= _MAX_TILE_B and B % t == 0:
            return t
    return B   # batch not a multiple of 8: single full-dim tile (always legal)


@partial(jax.jit, static_argnames=("nail_size", "hammer_size", "force_tiled", "tile_b"))
def mlpae_forward(x, packed, *, nail_size, hammer_size, force_tiled=False, tile_b=None):
    """MLPAE.forward(x, train_yes) -> (z0 encoded, z1 reconstructed)."""
    assert x.shape[1] == nail_size
    B = x.shape[0]

    if force_tiled or B > _FUSED_MAX_BATCH:
        tb = tile_b if tile_b is not None else _pick_tile_b(B)
        assert B % tb == 0, "tile_b must divide the batch size"
        z0p, z1p = _forward_tiled(x, packed, tb)
    else:
        z0p, z1p = _forward_fused(x, packed)

    return z0p[:, :hammer_size], z1p[:, :nail_size]


# --------------------------------------------------------------------------- #
# Pure-JAX f32 reference (PyTorch semantics, biases included)
# --------------------------------------------------------------------------- #
def mlpae_reference(x, params):
    (ew1, eb1, eg1, ebeta1, ew2, eb2, ew3, eb3,
     dw1, db1, dg1, dbeta1, dw2, db2, dw3, db3) = params

    def bn(h, g, b):
        m = jnp.mean(h, axis=0, keepdims=True)
        v = jnp.mean((h - m) ** 2, axis=0, keepdims=True)
        return (h - m) / jnp.sqrt(v + BN_EPS) * g + b

    h = x @ ew1 + eb1
    h = jnp.maximum(bn(h, eg1, ebeta1), 0.0)
    h = jnp.maximum(h @ ew2 + eb2, 0.0)
    z0 = jnp.tanh(h @ ew3 + eb3)

    d = z0 @ dw1 + db1
    d = jnp.maximum(bn(d, dg1, dbeta1), 0.0)
    d = jnp.maximum(d @ dw2 + db2, 0.0)
    z1 = d @ dw3 + db3
    return z0, z1


# --------------------------------------------------------------------------- #
if __name__ == "__main__":
    # MLPAE(nail_size=64, hidden_size=32, hammer_size=32)
    # (hidden_size is unused by the PyTorch __init__; widths are hardcoded 256/128)
    nail_size, hammer_size = 64, 32
    key = jax.random.PRNGKey(0)
    kx1, kx2, kp = jax.random.split(key, 3)

    params = init_params(kp, nail_size, hammer_size)
    packed = pack_params(params, nail_size, hammer_size)

    # bf16 MXU operands -> compare against the f32 reference with loosened tolerance
    TOL = dict(atol=5e-2, rtol=5e-2)

    # --- path 1: small batch, single fused call ---
    B1 = 8
    x1 = jax.random.normal(kx1, (B1, nail_size), jnp.float32)
    z0, z1 = mlpae_forward(x1, packed, nail_size=nail_size, hammer_size=hammer_size)
    jax.block_until_ready((z0, z1))
    z0r, z1r = mlpae_reference(x1, params)
    assert z0.shape == (B1, hammer_size) and z1.shape == (B1, nail_size)
    assert bool(jnp.allclose(z0, z0r, **TOL)), float(jnp.max(jnp.abs(z0 - z0r)))
    assert bool(jnp.allclose(z1, z1r, **TOL)), float(jnp.max(jnp.abs(z1 - z1r)))

    # --- path 2: batch-tiled 3-stage pipeline (exact full-batch BN, parallel tiles) ---
    B2, TILE = 256, 64
    x2 = jax.random.normal(kx2, (B2, nail_size), jnp.float32)
    z0t, z1t = mlpae_forward(x2, packed, nail_size=nail_size, hammer_size=hammer_size,
                             force_tiled=True, tile_b=TILE)
    jax.block_until_ready((z0t, z1t))
    z0tr, z1tr = mlpae_reference(x2, params)
    assert z0t.shape == (B2, hammer_size) and z1t.shape == (B2, nail_size)
    assert bool(jnp.allclose(z0t, z0tr, **TOL)), float(jnp.max(jnp.abs(z0t - z0tr)))
    assert bool(jnp.allclose(z1t, z1tr, **TOL)), float(jnp.max(jnp.abs(z1t - z1tr)))

    print("KERNEL_OK")
</pallas_src>

<mosaic_0001>
module attributes {stable_mosaic.version = 11 : i64} {
  func.func @_fused_kernel(%arg0: memref<8x64xf32, #tpu.memory_space<vmem>>, %arg1: memref<64x256xbf16, #tpu.memory_space<vmem>>, %arg2: memref<1x256xf32, #tpu.memory_space<vmem>>, %arg3: memref<1x256xf32, #tpu.memory_space<vmem>>, %arg4: memref<256x128xbf16, #tpu.memory_space<vmem>>, %arg5: memref<1x128xf32, #tpu.memory_space<vmem>>, %arg6: memref<128x128xbf16, #tpu.memory_space<vmem>>, %arg7: memref<1x128xf32, #tpu.memory_space<vmem>>, %arg8: memref<128x128xbf16, #tpu.memory_space<vmem>>, %arg9: memref<1x128xf32, #tpu.memory_space<vmem>>, %arg10: memref<1x128xf32, #tpu.memory_space<vmem>>, %arg11: memref<128x256xbf16, #tpu.memory_space<vmem>>, %arg12: memref<1x256xf32, #tpu.memory_space<vmem>>, %arg13: memref<256x128xbf16, #tpu.memory_space<vmem>>, %arg14: memref<1x128xf32, #tpu.memory_space<vmem>>, %arg15: memref<8x128xf32, #tpu.memory_space<vmem>>, %arg16: memref<8x128xf32, #tpu.memory_space<vmem>>) attributes {dimension_semantics = [], scalar_prefetch = 0 : i64, scratch_operands = 0 : i64, tpu.core_type = #tpu.core_type<tc>} {
    %c0 = arith.constant 0 : index
    %c0_0 = arith.constant 0 : index
    %0 = vector.load %arg0[%c0, %c0_0] : memref<8x64xf32, #tpu.memory_space<vmem>>, vector<8x64xf32>
    %1 = arith.truncf %0 : vector<8x64xf32> to vector<8x64xbf16>
    %c0_1 = arith.constant 0 : index
    %c0_2 = arith.constant 0 : index
    %2 = vector.load %arg1[%c0_1, %c0_2] : memref<64x256xbf16, #tpu.memory_space<vmem>>, vector<64x256xbf16>
    %cst = arith.constant dense<0.000000e+00> : vector<8x256xf32>
    %3 = tpu.matmul %1, %2, %cst {dimension_numbers = #tpu.dot_dimension_numbers<[1], [0], [0], [1], [0, 0, 1, 1], [], []>} : vector<8x64xbf16>, vector<64x256xbf16>, vector<8x256xf32> -> vector<8x256xf32>
    %cst_3 = arith.constant dense<0.000000e+00> : vector<256xf32>
    %4 = vector.multi_reduction <add>, %3, %cst_3 [0] : vector<8x256xf32> to vector<256xf32>
    %5 = vector.shape_cast %4 : vector<256xf32> to vector<1x256xf32>
    %6 = arith.mulf %3, %3 : vector<8x256xf32>
    %cst_4 = arith.constant dense<0.000000e+00> : vector<256xf32>
    %7 = vector.multi_reduction <add>, %6, %cst_4 [0] : vector<8x256xf32> to vector<256xf32>
    %8 = vector.shape_cast %7 : vector<256xf32> to vector<1x256xf32>
    %c0_5 = arith.constant 0 : index
    %c0_6 = arith.constant 0 : index
    %9 = vector.load %arg2[%c0_5, %c0_6] : memref<1x256xf32, #tpu.memory_space<vmem>>, vector<1x256xf32>
    %c0_7 = arith.constant 0 : index
    %c0_8 = arith.constant 0 : index
    %10 = vector.load %arg3[%c0_7, %c0_8] : memref<1x256xf32, #tpu.memory_space<vmem>>, vector<1x256xf32>
    %cst_9 = arith.constant 1.250000e-01 : f32
    %11 = vector.broadcast %cst_9 : f32 to vector<1x256xf32>
    %12 = arith.mulf %5, %11 : vector<1x256xf32>
    %cst_10 = arith.constant 1.250000e-01 : f32
    %13 = vector.broadcast %cst_10 : f32 to vector<1x256xf32>
    %14 = arith.mulf %8, %13 : vector<1x256xf32>
    %15 = arith.mulf %12, %12 : vector<1x256xf32>
    %16 = arith.subf %14, %15 : vector<1x256xf32>
    %cst_11 = arith.constant 0.000000e+00 : f32
    %17 = vector.broadcast %cst_11 : f32 to vector<1x256xf32>
    %18 = arith.maximumf %16, %17 : vector<1x256xf32>
    %cst_12 = arith.constant 9.99999974E-6 : f32
    %19 = vector.broadcast %cst_12 : f32 to vector<1x256xf32>
    %20 = arith.addf %18, %19 : vector<1x256xf32>
    %21 = math.rsqrt %20 : vector<1x256xf32>
    %22 = arith.mulf %9, %21 : vector<1x256xf32>
    %23 = arith.mulf %12, %22 : vector<1x256xf32>
    %24 = arith.subf %10, %23 : vector<1x256xf32>
    %25 = vector.broadcast %22 : vector<1x256xf32> to vector<8x256xf32>
    %26 = arith.mulf %3, %25 : vector<8x256xf32>
    %27 = vector.broadcast %24 : vector<1x256xf32> to vector<8x256xf32>
    %28 = arith.addf %26, %27 : vector<8x256xf32>
    %cst_13 = arith.constant 0.000000e+00 : f32
    %29 = vector.broadcast %cst_13 : f32 to vector<8x256xf32>
    %30 = arith.maximumf %28, %29 : vector<8x256xf32>
    %31 = arith.truncf %30 : vector<8x256xf32> to vector<8x256xbf16>
    %c0_14 = arith.constant 0 : index
    %c0_15 = arith.constant 0 : index
    %32 = vector.load %arg4[%c0_14, %c0_15] : memref<256x128xbf16, #tpu.memory_space<vmem>>, vector<256x128xbf16>
    %cst_16 = arith.constant dense<0.000000e+00> : vector<8x128xf32>
    %33 = tpu.matmul %31, %32, %cst_16 {dimension_numbers = #tpu.dot_dimension_numbers<[1], [0], [0], [1], [0, 0, 1, 1], [], []>} : vector<8x256xbf16>, vector<256x128xbf16>, vector<8x128xf32> -> vector<8x128xf32>
    %c0_17 = arith.constant 0 : index
    %c0_18 = arith.constant 0 : index
    %34 = vector.load %arg5[%c0_17, %c0_18] : memref<1x128xf32, #tpu.memory_space<vmem>>, vector<1x128xf32>
    %35 = vector.broadcast %34 : vector<1x128xf32> to vector<8x128xf32>
    %36 = arith.addf %33, %35 : vector<8x128xf32>
    %cst_19 = arith.constant 0.000000e+00 : f32
    %37 = vector.broadcast %cst_19 : f32 to vector<8x128xf32>
    %38 = arith.maximumf %36, %37 : vector<8x128xf32>
    %39 = arith.truncf %38 : vector<8x128xf32> to vector<8x128xbf16>
    %c0_20 = arith.constant 0 : index
    %c0_21 = arith.constant 0 : index
    %40 = vector.load %arg6[%c0_20, %c0_21] : memref<128x128xbf16, #tpu.memory_space<vmem>>, vector<128x128xbf16>
    %cst_22 = arith.constant dense<0.000000e+00> : vector<8x128xf32>
    %41 = tpu.matmul %39, %40, %cst_22 {dimension_numbers = #tpu.dot_dimension_numbers<[1], [0], [0], [1], [0, 0, 1, 1], [], []>} : vector<8x128xbf16>, vector<128x128xbf16>, vector<8x128xf32> -> vector<8x128xf32>
    %c0_23 = arith.constant 0 : index
    %c0_24 = arith.constant 0 : index
    %42 = vector.load %arg7[%c0_23, %c0_24] : memref<1x128xf32, #tpu.memory_space<vmem>>, vector<1x128xf32>
    %43 = vector.broadcast %42 : vector<1x128xf32> to vector<8x128xf32>
    %44 = arith.addf %41, %43 : vector<8x128xf32>
    %45 = math.tanh %44 : vector<8x128xf32>
    %c0_25 = arith.constant 0 : index
    %c0_26 = arith.constant 0 : index
    %46 = vector.load %arg15[%c0_25, %c0_26] : memref<8x128xf32, #tpu.memory_space<vmem>>, vector<8x128xf32>
    tpu.vector_store %arg15[%c0_25, %c0_26], %45 {strides = array<i32>} : memref<8x128xf32, #tpu.memory_space<vmem>>, vector<8x128xf32>,
    %47 = arith.truncf %45 : vector<8x128xf32> to vector<8x128xbf16>
    %c0_27 = arith.constant 0 : index
    %c0_28 = arith.constant 0 : index
    %48 = vector.load %arg8[%c0_27, %c0_28] : memref<128x128xbf16, #tpu.memory_space<vmem>>, vector<128x128xbf16>
    %cst_29 = arith.constant dense<0.000000e+00> : vector<8x128xf32>
    %49 = tpu.matmul %47, %48, %cst_29 {dimension_numbers = #tpu.dot_dimension_numbers<[1], [0], [0], [1], [0, 0, 1, 1], [], []>} : vector<8x128xbf16>, vector<128x128xbf16>, vector<8x128xf32> -> vector<8x128xf32>
    %cst_30 = arith.constant dense<0.000000e+00> : vector<128xf32>
    %50 = vector.multi_reduction <add>, %49, %cst_30 [0] : vector<8x128xf32> to vector<128xf32>
    %51 = vector.shape_cast %50 : vector<128xf32> to vector<1x128xf32>
    %52 = arith.mulf %49, %49 : vector<8x128xf32>
    %cst_31 = arith.constant dense<0.000000e+00> : vector<128xf32>
    %53 = vector.multi_reduction <add>, %52, %cst_31 [0] : vector<8x128xf32> to vector<128xf32>
    %54 = vector.shape_cast %53 : vector<128xf32> to vector<1x128xf32>
    %c0_32 = arith.constant 0 : index
    %c0_33 = arith.constant 0 : index
    %55 = vector.load %arg9[%c0_32, %c0_33] : memref<1x128xf32, #tpu.memory_space<vmem>>, vector<1x128xf32>
    %c0_34 = arith.constant 0 : index
    %c0_35 = arith.constant 0 : index
    %56 = vector.load %arg10[%c0_34, %c0_35] : memref<1x128xf32, #tpu.memory_space<vmem>>, vector<1x128xf32>
    %cst_36 = arith.constant 1.250000e-01 : f32
    %57 = vector.broadcast %cst_36 : f32 to vector<1x128xf32>
    %58 = arith.mulf %51, %57 : vector<1x128xf32>
    %cst_37 = arith.constant 1.250000e-01 : f32
    %59 = vector.broadcast %cst_37 : f32 to vector<1x128xf32>
    %60 = arith.mulf %54, %59 : vector<1x128xf32>
    %61 = arith.mulf %58, %58 : vector<1x128xf32>
    %62 = arith.subf %60, %61 : vector<1x128xf32>
    %cst_38 = arith.constant 0.000000e+00 : f32
    %63 = vector.broadcast %cst_38 : f32 to vector<1x128xf32>
    %64 = arith.maximumf %62, %63 : vector<1x128xf32>
    %cst_39 = arith.constant 9.99999974E-6 : f32
    %65 = vector.broadcast %cst_39 : f32 to vector<1x128xf32>
    %66 = arith.addf %64, %65 : vector<1x128xf32>
    %67 = math.rsqrt %66 : vector<1x128xf32>
    %68 = arith.mulf %55, %67 : vector<1x128xf32>
    %69 = arith.mulf %58, %68 : vector<1x128xf32>
    %70 = arith.subf %56, %69 : vector<1x128xf32>
    %71 = vector.broadcast %68 : vector<1x128xf32> to vector<8x128xf32>
    %72 = arith.mulf %49, %71 : vector<8x128xf32>
    %73 = vector.broadcast %70 : vector<1x128xf32> to vector<8x128xf32>
    %74 = arith.addf %72, %73 : vector<8x128xf32>
    %cst_40 = arith.constant 0.000000e+00 : f32
    %75 = vector.broadcast %cst_40 : f32 to vector<8x128xf32>
    %76 = arith.maximumf %74, %75 : vector<8x128xf32>
    %77 = arith.truncf %76 : vector<8x128xf32> to vector<8x128xbf16>
    %c0_41 = arith.constant 0 : index
    %c0_42 = arith.constant 0 : index
    %78 = vector.load %arg11[%c0_41, %c0_42] : memref<128x256xbf16, #tpu.memory_space<vmem>>, vector<128x256xbf16>
    %cst_43 = arith.constant dense<0.000000e+00> : vector<8x256xf32>
    %79 = tpu.matmul %77, %78, %cst_43 {dimension_numbers = #tpu.dot_dimension_numbers<[1], [0], [0], [1], [0, 0, 1, 1], [], []>} : vector<8x128xbf16>, vector<128x256xbf16>, vector<8x256xf32> -> vector<8x256xf32>
    %c0_44 = arith.constant 0 : index
    %c0_45 = arith.constant 0 : index
    %80 = vector.load %arg12[%c0_44, %c0_45] : memref<1x256xf32, #tpu.memory_space<vmem>>, vector<1x256xf32>
    %81 = vector.broadcast %80 : vector<1x256xf32> to vector<8x256xf32>
    %82 = arith.addf %79, %81 : vector<8x256xf32>
    %cst_46 = arith.constant 0.000000e+00 : f32
    %83 = vector.broadcast %cst_46 : f32 to vector<8x256xf32>
    %84 = arith.maximumf %82, %83 : vector<8x256xf32>
    %85 = arith.truncf %84 : vector<8x256xf32> to vector<8x256xbf16>
    %c0_47 = arith.constant 0 : index
    %c0_48 = arith.constant 0 : index
    %86 = vector.load %arg13[%c0_47, %c0_48] : memref<256x128xbf16, #tpu.memory_space<vmem>>, vector<256x128xbf16>
    %cst_49 = arith.constant dense<0.000000e+00> : vector<8x128xf32>
    %87 = tpu.matmul %85, %86, %cst_49 {dimension_numbers = #tpu.dot_dimension_numbers<[1], [0], [0], [1], [0, 0, 1, 1], [], []>} : vector<8x256xbf16>, vector<256x128xbf16>, vector<8x128xf32> -> vector<8x128xf32>
    %c0_50 = arith.constant 0 : index
    %c0_51 = arith.constant 0 : index
    %88 = vector.load %arg14[%c0_50, %c0_51] : memref<1x128xf32, #tpu.memory_space<vmem>>, vector<1x128xf32>
    %89 = vector.broadcast %88 : vector<1x128xf32> to vector<8x128xf32>
    %90 = arith.addf %87, %89 : vector<8x128xf32>
    %c0_52 = arith.constant 0 : index
    %c0_53 = arith.constant 0 : index
    %91 = vector.load %arg16[%c0_52, %c0_53] : memref<8x128xf32, #tpu.memory_space<vmem>>, vector<8x128xf32>
    tpu.vector_store %arg16[%c0_52, %c0_53], %90 {strides = array<i32>} : memref<8x128xf32, #tpu.memory_space<vmem>>, vector<8x128xf32>,
    return
  }
}

</mosaic_0001>

<llo_original>
// kernel: mlpae_forward.1
$region0: #{mlpae_forward.1}
  #allocation0 [shape = 'u32[]', space=smem, size = 0x4, offset = 0x4, fixed_abs, tag = 'smem constant byte address 0x4 - core index']
  #allocation1 [shape = 'u32[144,128]{1,0:T(1,128)}', space=vmem, size = 0x12000, scoped, tag = 'internal scratch']
  %s0 = inlined_call_operand.hbm [shape: f32[8,64], index: 0, kind: input, shape index: {}]
  %s1 = inlined_call_operand.hbm [shape: bf16[64,256], index: 1, kind: input, shape index: {}]
  %s2 = inlined_call_operand.vmem [shape: f32[1,256], index: 2, kind: input, shape index: {}]
  %s3 = inlined_call_operand.vmem [shape: f32[1,256], index: 3, kind: input, shape index: {}]
  %s4 = inlined_call_operand.hbm [shape: bf16[256,128], index: 4, kind: input, shape index: {}]
  %s5 = inlined_call_operand.vmem [shape: f32[1,128], index: 5, kind: input, shape index: {}]
  %s6 = inlined_call_operand.hbm [shape: bf16[128,128], index: 6, kind: input, shape index: {}]
  %s7 = inlined_call_operand.vmem [shape: f32[1,128], index: 7, kind: input, shape index: {}]
  %s8 = inlined_call_operand.hbm [shape: bf16[128,128], index: 8, kind: input, shape index: {}]
  %s9 = inlined_call_operand.vmem [shape: f32[1,128], index: 9, kind: input, shape index: {}]
  %s10 = inlined_call_operand.vmem [shape: f32[1,128], index: 10, kind: input, shape index: {}]
  %s11 = inlined_call_operand.hbm [shape: bf16[128,256], index: 11, kind: input, shape index: {}]
  %s12 = inlined_call_operand.hbm [shape: f32[1,256], index: 12, kind: input, shape index: {}]
  %s13 = inlined_call_operand.hbm [shape: bf16[256,128], index: 13, kind: input, shape index: {}]
  %s14 = inlined_call_operand.hbm [shape: f32[1,128], index: 14, kind: input, shape index: {}]
  %s15 = inlined_call_operand.hbm [shape: f32[8,128], index: 15, kind: output, shape index: {0}]
  %s16 = inlined_call_operand.hbm [shape: f32[8,128], index: 16, kind: output, shape index: {1}]
  %17 = xla_tuple %s15, %s16
  %s18 = sld [smem:[#allocation0]]
  $region114: #{mlpae_forward.1} parent=0
    _
  %s20 = ssub.s32 1, %s18
  %s21 = scalar_select 0, %s20, %s18
  $region1: #{mlpae_forward.1} parent=0
    #allocation2 [shape = 'u8[4096]{0}', space=vmem, size = 0x1000, scoped, tag = 'input window, operand 0, single buffered']
    #allocation3 [shape = 's32[1]{0}', space=sflag, size = 0x4, scoped, tag = 'scoped memory for mlpae_forward.1']
    #allocation4 [shape = 's32[1]{0}', space=sflag, size = 0x4, scoped, tag = 'scoped memory for mlpae_forward.1']
    #allocation5 [shape = 'u8[32768]{0}', space=vmem, size = 0x8000, scoped, tag = 'input window, operand 1, single buffered']
    #allocation6 [shape = 's32[1]{0}', space=sflag, size = 0x4, scoped, tag = 'scoped memory for mlpae_forward.1']
    #allocation7 [shape = 'u8[65536]{0}', space=vmem, size = 0x10000, scoped, tag = 'input window, operand 4, single buffered']
    #allocation8 [shape = 'u8[32768]{0}', space=vmem, size = 0x8000, scoped, tag = 'input window, operand 6, single buffered']
    #allocation9 [shape = 's32[1]{0}', space=sflag, size = 0x4, scoped, tag = 'scoped memory for mlpae_forward.1']
    #allocation10 [shape = 'u8[32768]{0}', space=vmem, size = 0x8000, scoped, tag = 'input window, operand 8, single buffered']
    #allocation11 [shape = 'u8[65536]{0}', space=vmem, size = 0x10000, scoped, tag = 'input window, operand 11, single buffered']
    #allocation12 [shape = 's32[1]{0}', space=sflag, size = 0x4, scoped, tag = 'scoped memory for mlpae_forward.1']
    #allocation13 [shape = 'u8[1024]{0}', space=vmem, size = 0x400, scoped, tag = 'input window, operand 12, single buffered']
    #allocation14 [shape = 'u8[65536]{0}', space=vmem, size = 0x10000, scoped, tag = 'input window, operand 13, single buffered']
    #allocation15 [shape = 's32[1]{0}', space=sflag, size = 0x4, scoped, tag = 'scoped memory for mlpae_forward.1']
    #allocation16 [shape = 'u8[512]{0}', space=vmem, size = 0x400, scoped, tag = 'input window, operand 14, single buffered']
    #allocation17 [shape = 'u8[4096]{0}', space=vmem, size = 0x1000, scoped, tag = 'output window, operand 0, single buffered']
    #allocation18 [shape = 'u8[4096]{0}', space=vmem, size = 0x1000, scoped, tag = 'output window, operand 1, single buffered']
    #allocation19 [shape = 's32[1]{0}', space=sflag, size = 0x4, scoped, tag = 'scoped memory for mlpae_forward.1']
    %22 = vsyncpa [#allocation3], 0
    %23 = vsyncpa [#allocation6], 0
    %24 = vsyncpa [#allocation9], 0
    %25 = vsyncpa [#allocation12], 0
    %26 = vsyncpa [#allocation15], 0
    %27 = vsyncpa [#allocation4], 0
    %28 = vsyncpa [#allocation19], 0
    // Predicated region
    $region2: #{mlpae_forward.1} parent=1 // pred_check
      _
    $region3: #{mlpae_forward.1} parent=1 // pred_check_branch
      %30 = sbr.rel (0) target = $region5
    $region4: #{mlpae_forward.1} parent=1 // pred_region
      %s32 = ssub.s32 128, 128
      %33 = vsyncadd [#allocation3], %s32
      %s35 = sshll.u32 [#allocation2], 4
      %s36 = int_to_ptr.vmem [resolvable:$true] %s35
      %38 = dma.hbm_to_vmem [thread:$0]  %s0, 128, %s36, [#allocation3]
    $region5: #{mlpae_forward.1} parent=1 // pred_fallthru
      _
    // Predicated region
    $region6: #{mlpae_forward.1} parent=1 // pred_check
      _
    $region7: #{mlpae_forward.1} parent=1 // pred_check_branch
      %40 = sbr.rel (0) target = $region9
    $region8: #{mlpae_forward.1} parent=1 // pred_region
      %s42 = ssub.s32 1024, 1024
      %43 = vsyncadd [#allocation6], %s42
      %s44 = sshll.u32 [#allocation5], 4
      %s45 = int_to_ptr.vmem [resolvable:$true] %s44
      %50 = dma.hbm_to_vmem [thread:$0]  %s1, 1024, %s45, [#allocation6], 128, 128, 8
    $region9: #{mlpae_forward.1} parent=1 // pred_fallthru
      _
    // Predicated region
    $region10: #{mlpae_forward.1} parent=1 // pred_check
      _
    $region11: #{mlpae_forward.1} parent=1 // pred_check_branch
      %52 = sbr.rel (0) target = $region13
    $region12: #{mlpae_forward.1} parent=1 // pred_region
      _
    $region13: #{mlpae_forward.1} parent=1 // pred_fallthru
      _
    // Predicated region
    $region14: #{mlpae_forward.1} parent=1 // pred_check
      _
    $region15: #{mlpae_forward.1} parent=1 // pred_check_branch
      %54 = sbr.rel (0) target = $region17
    $region16: #{mlpae_forward.1} parent=1 // pred_region
      _
    $region17: #{mlpae_forward.1} parent=1 // pred_fallthru
      _
    // Predicated region
    $region18: #{mlpae_forward.1} parent=1 // pred_check
      _
    $region19: #{mlpae_forward.1} parent=1 // pred_check_branch
      %56 = sbr.rel (0) target = $region21
    $region20: #{mlpae_forward.1} parent=1 // pred_region
      %s58 = ssub.s32 2048, 2048
      %59 = vsyncadd [#allocation6], %s58
      %s60 = sshll.u32 [#allocation7], 4
      %s61 = int_to_ptr.vmem [resolvable:$true] %s60
      %66 = dma.hbm_to_vmem [thread:$0]  %s4, 2048, %s61, [#allocation6], 64, 64, 4
    $region21: #{mlpae_forward.1} parent=1 // pred_fallthru
      _
    // Predicated region
    $region22: #{mlpae_forward.1} parent=1 // pred_check
      _
    $region23: #{mlpae_forward.1} parent=1 // pred_check_branch
      %68 = sbr.rel (0) target = $region25
    $region24: #{mlpae_forward.1} parent=1 // pred_region
      _
    $region25: #{mlpae_forward.1} parent=1 // pred_fallthru
      _
    // Predicated region
    $region26: #{mlpae_forward.1} parent=1 // pred_check
      _
    $region27: #{mlpae_forward.1} parent=1 // pred_check_branch
      %70 = sbr.rel (0) target = $region29
    $region28: #{mlpae_forward.1} parent=1 // pred_region
      %s72 = ssub.s32 1024, 1024
      %73 = vsyncadd [#allocation9], %s72
      %s74 = sshll.u32 [#allocation8], 4
      %s75 = int_to_ptr.vmem [resolvable:$true] %s74
      %80 = dma.hbm_to_vmem [thread:$0]  %s6, 1024, %s75, [#allocation9], 64, 64, 4
    $region29: #{mlpae_forward.1} parent=1 // pred_fallthru
      _
    // Predicated region
    $region30: #{mlpae_forward.1} parent=1 // pred_check
      _
    $region31: #{mlpae_forward.1} parent=1 // pred_check_branch
      %82 = sbr.rel (0) target = $region33
    $region32: #{mlpae_forward.1} parent=1 // pred_region
      _
    $region33: #{mlpae_forward.1} parent=1 // pred_fallthru
      _
    // Predicated region
    $region34: #{mlpae_forward.1} parent=1 // pred_check
      _
    $region35: #{mlpae_forward.1} parent=1 // pred_check_branch
      %84 = sbr.rel (0) target = $region37
    $region36: #{mlpae_forward.1} parent=1 // pred_region
      %s86 = ssub.s32 1024, 1024
      %87 = vsyncadd [#allocation9], %s86
      %s88 = sshll.u32 [#allocation10], 4
      %s89 = int_to_ptr.vmem [resolvable:$true] %s88
      %94 = dma.hbm_to_vmem [thread:$0]  %s8, 1024, %s89, [#allocation9], 64, 64, 4
    $region37: #{mlpae_forward.1} parent=1 // pred_fallthru
      _
    // Predicated region
    $region38: #{mlpae_forward.1} parent=1 // pred_check
      _
    $region39: #{mlpae_forward.1} parent=1 // pred_check_branch
      %96 = sbr.rel (0) target = $region41
    $region40: #{mlpae_forward.1} parent=1 // pred_region
      _
    $region41: #{mlpae_forward.1} parent=1 // pred_fallthru
      _
    // Predicated region
    $region42: #{mlpae_forward.1} parent=1 // pred_check
      _
    $region43: #{mlpae_forward.1} parent=1 // pred_check_branch
      %98 = sbr.rel (0) target = $region45
    $region44: #{mlpae_forward.1} parent=1 // pred_region
      _
    $region45: #{mlpae_forward.1} parent=1 // pred_fallthru
      _
    // Predicated region
    $region46: #{mlpae_forward.1} parent=1 // pred_check
      _
    $region47: #{mlpae_forward.1} parent=1 // pred_check_branch
      %100 = sbr.rel (0) target = $region49
    $region48: #{mlpae_forward.1} parent=1 // pred_region
      %s102 = ssub.s32 2048, 2048
      %103 = vsyncadd [#allocation12], %s102
      %s104 = sshll.u32 [#allocation11], 4
      %s105 = int_to_ptr.vmem [resolvable:$true] %s104
      %110 = dma.hbm_to_vmem [thread:$0]  %s11, 2048, %s105, [#allocation12], 128, 128, 8
    $region49: #{mlpae_forward.1} parent=1 // pred_fallthru
      _
    // Predicated region
    $region50: #{mlpae_forward.1} parent=1 // pred_check
      _
    $region51: #{mlpae_forward.1} parent=1 // pred_check_branch
      %112 = sbr.rel (0) target = $region53
    $region52: #{mlpae_forward.1} parent=1 // pred_region
      %s114 = ssub.s32 32, 32
      %115 = vsyncadd [#allocation12], %s114
      %s117 = sshll.u32 [#allocation13], 4
      %s118 = int_to_ptr.vmem [resolvable:$true] %s117
      %120 = dma.hbm_to_vmem [thread:$0]  %s12, 32, %s118, [#allocation12]
    $region53: #{mlpae_forward.1} parent=1 // pred_fallthru
      _
    // Predicated region
    $region54: #{mlpae_forward.1} parent=1 // pred_check
      _
    $region55: #{mlpae_forward.1} parent=1 // pred_check_branch
      %122 = sbr.rel (0) target = $region57
    $region56: #{mlpae_forward.1} parent=1 // pred_region
      %s124 = ssub.s32 2048, 2048
      %125 = vsyncadd [#allocation15], %s124
      %s126 = sshll.u32 [#allocation14], 4
      %s127 = int_to_ptr.vmem [resolvable:$true] %s126
      %132 = dma.hbm_to_vmem [thread:$0]  %s13, 2048, %s127, [#allocation15], 64, 64, 4
    $region57: #{mlpae_forward.1} parent=1 // pred_fallthru
      _
    // Predicated region
    $region58: #{mlpae_forward.1} parent=1 // pred_check
      _
    $region59: #{mlpae_forward.1} parent=1 // pred_check_branch
      %134 = sbr.rel (0) target = $region61
    $region60: #{mlpae_forward.1} parent=1 // pred_region
      %s136 = ssub.s32 16, 16
      %137 = vsyncadd [#allocation15], %s136
      %s139 = sshll.u32 [#allocation16], 4
      %s140 = int_to_ptr.vmem [resolvable:$true] %s139
      %142 = dma.hbm_to_vmem [thread:$0]  %s14, 16, %s140, [#allocation15]
    $region61: #{mlpae_forward.1} parent=1 // pred_fallthru
      _
    // Predicated region
    $region62: #{mlpae_forward.1} parent=1 // pred_check
      _
    $region63: #{mlpae_forward.1} parent=1 // pred_check_branch
      %144 = sbr.rel (0) target = $region65
    $region64: #{mlpae_forward.1} parent=1 // pred_region
      %145 = dma.done [#allocation3], 128
    $region65: #{mlpae_forward.1} parent=1 // pred_fallthru
      _
    // Predicated region
    $region66: #{mlpae_forward.1} parent=1 // pred_check
      _
    $region67: #{mlpae_forward.1} parent=1 // pred_check_branch
      %147 = sbr.rel (0) target = $region69
    $region68: #{mlpae_forward.1} parent=1 // pred_region
      %148 = dma.done [#allocation6], 1024
    $region69: #{mlpae_forward.1} parent=1 // pred_fallthru
      _
    // Predicated region
    $region70: #{mlpae_forward.1} parent=1 // pred_check
      _
    $region71: #{mlpae_forward.1} parent=1 // pred_check_branch
      %150 = sbr.rel (0) target = $region73
    $region72: #{mlpae_forward.1} parent=1 // pred_region
      %151 = dma.done [#allocation6], 2048
    $region73: #{mlpae_forward.1} parent=1 // pred_fallthru
      _
    // Predicated region
    $region74: #{mlpae_forward.1} parent=1 // pred_check
      _
    $region75: #{mlpae_forward.1} parent=1 // pred_check_branch
      %153 = sbr.rel (0) target = $region77
    $region76: #{mlpae_forward.1} parent=1 // pred_region
      %154 = dma.done [#allocation9], 1024
    $region77: #{mlpae_forward.1} parent=1 // pred_fallthru
      _
    // Predicated region
    $region78: #{mlpae_forward.1} parent=1 // pred_check
      _
    $region79: #{mlpae_forward.1} parent=1 // pred_check_branch
      %156 = sbr.rel (0) target = $region81
    $region80: #{mlpae_forward.1} parent=1 // pred_region
      %157 = dma.done [#allocation9], 1024
    $region81: #{mlpae_forward.1} parent=1 // pred_fallthru
      _
    // Predicated region
    $region82: #{mlpae_forward.1} parent=1 // pred_check
      _
    $region83: #{mlpae_forward.1} parent=1 // pred_check_branch
      %159 = sbr.rel (0) target = $region85
    $region84: #{mlpae_forward.1} parent=1 // pred_region
      %160 = dma.done [#allocation12], 2048
    $region85: #{mlpae_forward.1} parent=1 // pred_fallthru
      _
    // Predicated region
    $region86: #{mlpae_forward.1} parent=1 // pred_check
      _
    $region87: #{mlpae_forward.1} parent=1 // pred_check_branch
      %162 = sbr.rel (0) target = $region89
    $region88: #{mlpae_forward.1} parent=1 // pred_region
      %163 = dma.done [#allocation12], 32
    $region89: #{mlpae_forward.1} parent=1 // pred_fallthru
      _
    // Predicated region
    $region90: #{mlpae_forward.1} parent=1 // pred_check
      _
    $region91: #{mlpae_forward.1} parent=1 // pred_check_branch
      %165 = sbr.rel (0) target = $region93
    $region92: #{mlpae_forward.1} parent=1 // pred_region
      %166 = dma.done [#allocation15], 2048
    $region93: #{mlpae_forward.1} parent=1 // pred_fallthru
      _
    // Predicated region
    $region94: #{mlpae_forward.1} parent=1 // pred_check
      _
    $region95: #{mlpae_forward.1} parent=1 // pred_check_branch
      %168 = sbr.rel (0) target = $region97
    $region96: #{mlpae_forward.1} parent=1 // pred_region
      %169 = dma.done [#allocation15], 16
    $region97: #{mlpae_forward.1} parent=1 // pred_fallthru
      _
    %v171 = vld [vmem:[#allocation2] sm:$0xff]
    %v172 = vpack.c.bf16 %v171, %v171
    %v173 = vld [vmem:[#allocation5] sm:$0xff]
    %v174 = vld [vmem:[#allocation5 + $0x8] sm:$0xff]
    %v175 = vld [vmem:[#allocation5 + $0x10] sm:$0xff]
    %v176 = vld [vmem:[#allocation5 + $0x18] sm:$0xff]
    %v177 = vld [vmem:[#allocation5 + $0x20] sm:$0xff]
    %v178 = vld [vmem:[#allocation5 + $0x28] sm:$0xff]
    %v179 = vld [vmem:[#allocation5 + $0x30] sm:$0xff]
    %v180 = vld [vmem:[#allocation5 + $0x38] sm:$0xff]
    %v189 = vunpack.c.l.b16 %v173
    %v190 = vunpack.c.h.b16 %v173
    %v191 = vunpack.c.l.b16 %v174
    %v192 = vunpack.c.h.b16 %v174
    %v193 = vunpack.c.l.b16 %v175
    %v194 = vunpack.c.h.b16 %v175
    %v195 = vunpack.c.l.b16 %v176
    %v196 = vunpack.c.h.b16 %v176
    %v197 = vunpack.c.l.b16 %v177
    %v198 = vunpack.c.h.b16 %v177
    %v199 = vunpack.c.l.b16 %v178
    %v200 = vunpack.c.h.b16 %v178
    %v201 = vunpack.c.l.b16 %v179
    %v202 = vunpack.c.h.b16 %v179
    %v203 = vunpack.c.l.b16 %v180
    %v204 = vunpack.c.h.b16 %v180
    %v205 = vpack.c.b16 %v191, %v189
    %v206 = vpack.c.b16 %v192, %v190
    %v207 = vpack.c.b16 %v195, %v193
    %v208 = vpack.c.b16 %v196, %v194
    %v209 = vpack.c.b16 %v199, %v197
    %v210 = vpack.c.b16 %v200, %v198
    %v211 = vpack.c.b16 %v203, %v201
    %v212 = vpack.c.b16 %v204, %v202
    %vm221 = vcmask 523264
    %v223 = vsel %vm221, %v172, 0
    %225 = vmatprep.subr.bf16.mxu0 %v206
    %226 = vmatpush1.bf16.msra.mxu0 %v205
    %227 = vmatprep.subr.bf16.mxu0 %v208
    %228 = vmatpush1.bf16.msra.mxu0 %v207
    %229 = vmatprep.subr.bf16.mxu0 %v210
    %230 = vmatpush1.bf16.msra.mxu0 %v209
    %231 = vmatprep.subr.bf16.mxu0 %v212
    %232 = vmatpush1.bf16.msra.mxu0 %v211
    %233 = vmatprep.subr.bf16.mxu0 0
    %234 = vmatpush1.bf16.msra.mxu0 0
    %235 = vmatprep.subr.bf16.mxu0 0
    %236 = vmatpush1.bf16.msra.mxu0 0
    %237 = vmatprep.subr.bf16.mxu0 0
    %238 = vmatpush1.bf16.msra.mxu0 0
    %239 = vmatprep.subr.bf16.mxu0 0
    %240 = vmatpush1.bf16.msra.mxu0 0
    %241 = vmatprep.subr.bf16.mxu0 0
    %242 = vmatpush1.bf16.msra.mxu0 0
    %243 = vmatprep.subr.bf16.mxu0 0
    %244 = vmatpush1.bf16.msra.mxu0 0
    %245 = vmatprep.subr.bf16.mxu0 0
    %246 = vmatpush1.bf16.msra.mxu0 0
    %247 = vmatprep.subr.bf16.mxu0 0
    %248 = vmatpush1.bf16.msra.mxu0 0
    %249 = vmatprep.subr.bf16.mxu0 0
    %250 = vmatpush1.bf16.msra.mxu0 0
    %251 = vmatprep.subr.bf16.mxu0 0
    %252 = vmatpush1.bf16.msra.mxu0 0
    %253 = vmatprep.subr.bf16.mxu0 0
    %254 = vmatpush1.bf16.msra.mxu0 0
    %255 = vmatprep.subr.bf16.mxu0 0
    %256 = vmatpush1.bf16.msra.mxu0 0
    %257 = vmatprep.mubr.bf16.mxu0 0
    %258 = vmatmul.mubr.bf16.gmra.mrb[0].mxu0 %v223
    %v259 = vpop.f32.mrb[0].mxu0
    %v260 = vadd.f32 0.0, %v259
    %v261 = vpop.f32.mrb[0].mxu0
    %v262 = vadd.f32 0.0, %v261
    %v263 = vpop.f32.mrb[0].mxu0
    %v264 = vpop.f32.mrb[0].mxu0
    %265 = vdwg.mxu0
    %v266 = vrot.slane %v260, 4
    %v267 = vadd.f32 %v260, %v266
    %v268 = vrot.slane %v267, 2
    %v269 = vadd.f32 %v267, %v268
    %v270 = vrot.slane %v269, 1
    %v271 = vadd.f32 %v269, %v270
    %v272 = vrot.slane %v262, 4
    %v273 = vadd.f32 %v262, %v272
    %v274 = vrot.slane %v273, 2
    %v275 = vadd.f32 %v273, %v274
    %v276 = vrot.slane %v275, 1
    %v277 = vadd.f32 %v275, %v276
    %v278 = vmul.f32 %v260, %v260
    %v279 = vmul.f32 %v262, %v262
    %v280 = vrot.slane %v278, 4
    %v281 = vadd.f32 %v278, %v280
    %v282 = vrot.slane %v281, 2
    %v283 = vadd.f32 %v281, %v282
    %v284 = vrot.slane %v283, 1
    %v285 = vadd.f32 %v283, %v284
    %v286 = vrot.slane %v279, 4
    %v287 = vadd.f32 %v279, %v286
    %v288 = vrot.slane %v287, 2
    %v289 = vadd.f32 %v287, %v288
    %v290 = vrot.slane %v289, 1
    %v291 = vadd.f32 %v289, %v290
    %v292 = vld [vmem:[%s2] sm:$0x3]
    %v293 = vld [vmem:[%s3] sm:$0x3]
    %v294 = vmul.f32 %v271, 0.125
    %v295 = vmul.f32 %v277, 0.125
    %v296 = vmul.f32 %v285, 0.125
    %v297 = vmul.f32 %v291, 0.125
    %v298 = vmul.f32 %v294, %v294
    %v299 = vmul.f32 %v295, %v295
    %v300 = vsub.f32 %v296, %v298
    %v301 = vsub.f32 %v297, %v299
    %v302 = vmax.f32 %v300, 0.0
    %v303 = vmax.f32 %v301, 0.0
    %v304 = vadd.f32 %v302, 1e-05
    %v305 = vadd.f32 %v303, 1e-05
    %v306 = vrsqrt.pop %v304
    %v307 = vrsqrt.pop %v305
    %v310 = vcombine.low %v306, %v307
    %v312 = vunpack.c.l.s4 1966171168
    %v313 = vunpack.c.0.s8 %v312
    %v314 = vlaneseq
    %v315 = vshrl.u32 %v314, 7
    %v316 = vsub.s32 %v313, %v315
    %v317 = vrot.slane %v310, %v316
    %v319 = vunpack.c.l.s4 1966171168
    %v320 = vunpack.c.0.s8 %v319
    %v321 = vlaneseq
    %v322 = vshrl.u32 %v321, 7
    %v323 = vsub.s32 %v320, %v322
    %v324 = vrot.slane %v317, %v323
    %v326 = vmul.f32 %v292, %v324
    %v328 = vlaneseq
    %v329 = vshrl.u32 %v328, 7
    %v330 = vsub.s32 0, %v329
    %v331 = vrot.slane %v326, %v330
    %v332 = vlaneseq
    %v333 = vshrl.u32 %v332, 7
    %v334 = vsub.s32 1, %v333
    %v335 = vrot.slane %v326, %v334
    %v338 = vmul.f32 %v294, %v331
    %v339 = vmul.f32 %v295, %v335
    %v342 = vcombine.low %v338, %v339
    %v344 = vunpack.c.l.s4 1966171168
    %v345 = vunpack.c.0.s8 %v344
    %v346 = vlaneseq
    %v347 = vshrl.u32 %v346, 7
    %v348 = vsub.s32 %v345, %v347
    %v349 = vrot.slane %v342, %v348
    %v351 = vunpack.c.l.s4 1966171168
    %v352 = vunpack.c.0.s8 %v351
    %v353 = vlaneseq
    %v354 = vshrl.u32 %v353, 7
    %v355 = vsub.s32 %v352, %v354
    %v356 = vrot.slane %v349, %v355
    %v358 = vsub.f32 %v293, %v356
    %v359 = vmul.f32 %v260, %v331
    %v360 = vmul.f32 %v262, %v335
    %v362 = vlaneseq
    %v363 = vshrl.u32 %v362, 7
    %v364 = vsub.s32 0, %v363
    %v365 = vrot.slane %v358, %v364
    %v366 = vlaneseq
    %v367 = vshrl.u32 %v366, 7
    %v368 = vsub.s32 1, %v367
    %v369 = vrot.slane %v358, %v368
    %v372 = vadd.f32 %v359, %v365
    %v373 = vadd.f32 %v360, %v369
    %v374 = vmax.f32 %v372, 0.0
    %v375 = vmax.f32 %v373, 0.0
    %v376 = vpack.c.bf16 %v374, %v374
    %v377 = vpack.c.bf16 %v375, %v375
    %v378 = vld [vmem:[#allocation7] sm:$0xf]
    %v379 = vld [vmem:[#allocation7 + $0x4] sm:$0xf]
    %v380 = vld [vmem:[#allocation7 + $0x8] sm:$0xf]
    %v381 = vld [vmem:[#allocation7 + $0xc] sm:$0xf]
    %v382 = vld [vmem:[#allocation7 + $0x10] sm:$0xf]
    %v383 = vld [vmem:[#allocation7 + $0x14] sm:$0xf]
    %v384 = vld [vmem:[#allocation7 + $0x18] sm:$0xf]
    %v385 = vld [vmem:[#allocation7 + $0x1c] sm:$0xf]
    %v386 = vld [vmem:[#allocation7 + $0x20] sm:$0xf]
    %v387 = vld [vmem:[#allocation7 + $0x24] sm:$0xf]
    %v388 = vld [vmem:[#allocation7 + $0x28] sm:$0xf]
    %v389 = vld [vmem:[#allocation7 + $0x2c] sm:$0xf]
    %v390 = vld [vmem:[#allocation7 + $0x30] sm:$0xf]
    %v391 = vld [vmem:[#allocation7 + $0x34] sm:$0xf]
    %v392 = vld [vmem:[#allocation7 + $0x38] sm:$0xf]
    %v393 = vld [vmem:[#allocation7 + $0x3c] sm:$0xf]
    %v394 = vld [vmem:[#allocation7 + $0x40] sm:$0xf]
    %v395 = vld [vmem:[#allocation7 + $0x44] sm:$0xf]
    %v396 = vld [vmem:[#allocation7 + $0x48] sm:$0xf]
    %v397 = vld [vmem:[#allocation7 + $0x4c] sm:$0xf]
    %v398 = vld [vmem:[#allocation7 + $0x50] sm:$0xf]
    %v399 = vld [vmem:[#allocation7 + $0x54] sm:$0xf]
    %v400 = vld [vmem:[#allocation7 + $0x58] sm:$0xf]
    %v401 = vld [vmem:[#allocation7 + $0x5c] sm:$0xf]
    %v402 = vld [vmem:[#allocation7 + $0x60] sm:$0xf]
    %v403 = vld [vmem:[#allocation7 + $0x64] sm:$0xf]
    %v404 = vld [vmem:[#allocation7 + $0x68] sm:$0xf]
    %v405 = vld [vmem:[#allocation7 + $0x6c] sm:$0xf]
    %v406 = vld [vmem:[#allocation7 + $0x70] sm:$0xf]
    %v407 = vld [vmem:[#allocation7 + $0x74] sm:$0xf]
    %v408 = vld [vmem:[#allocation7 + $0x78] sm:$0xf]
    %v409 = vld [vmem:[#allocation7 + $0x7c] sm:$0xf]
    %v410 = vld [vmem:[%s5] sm:$0x1]
    %v412 = vlaneseq
    %v413 = vshrl.u32 %v412, 7
    %v414 = vsub.s32 0, %v413
    %v415 = vrot.slane %v410, %v414
    %v449 = vunpack.c.l.b16 %v378
    %v450 = vunpack.c.l.b16 %v379
    %v451 = vunpack.c.l.b16 %v380
    %v452 = vunpack.c.l.b16 %v381
    %v453 = vunpack.c.l.b16 %v382
    %v454 = vunpack.c.l.b16 %v383
    %v455 = vunpack.c.l.b16 %v384
    %v456 = vunpack.c.l.b16 %v385
    %v457 = vunpack.c.l.b16 %v386
    %v458 = vunpack.c.l.b16 %v387
    %v459 = vunpack.c.l.b16 %v388
    %v460 = vunpack.c.l.b16 %v389
    %v461 = vunpack.c.l.b16 %v390
    %v462 = vunpack.c.l.b16 %v391
    %v463 = vunpack.c.l.b16 %v392
    %v464 = vunpack.c.l.b16 %v393
    %v465 = vunpack.c.l.b16 %v394
    %v466 = vunpack.c.l.b16 %v395
    %v467 = vunpack.c.l.b16 %v396
    %v468 = vunpack.c.l.b16 %v397
    %v469 = vunpack.c.l.b16 %v398
    %v470 = vunpack.c.l.b16 %v399
    %v471 = vunpack.c.l.b16 %v400
    %v472 = vunpack.c.l.b16 %v401
    %v473 = vunpack.c.l.b16 %v402
    %v474 = vunpack.c.l.b16 %v403
    %v475 = vunpack.c.l.b16 %v404
    %v476 = vunpack.c.l.b16 %v405
    %v477 = vunpack.c.l.b16 %v406
    %v478 = vunpack.c.l.b16 %v407
    %v479 = vunpack.c.l.b16 %v408
    %v480 = vunpack.c.l.b16 %v409
    %v481 = vpack.c.b16 %v450, %v449
    %v482 = vpack.c.b16 %v452, %v451
    %v483 = vpack.c.b16 %v454, %v453
    %v484 = vpack.c.b16 %v456, %v455
    %v485 = vpack.c.b16 %v458, %v457
    %v486 = vpack.c.b16 %v460, %v459
    %v487 = vpack.c.b16 %v462, %v461
    %v488 = vpack.c.b16 %v464, %v463
    %v489 = vpack.c.b16 %v466, %v465
    %v490 = vpack.c.b16 %v468, %v467
    %v491 = vpack.c.b16 %v470, %v469
    %v492 = vpack.c.b16 %v472, %v471
    %v493 = vpack.c.b16 %v474, %v473
    %v494 = vpack.c.b16 %v476, %v475
    %v495 = vpack.c.b16 %v478, %v477
    %v496 = vpack.c.b16 %v480, %v479
    %513 = vmatprep.subr.bf16.mxu0 0
    %514 = vmatpush1.bf16.msra.mxu0 %v481
    %515 = vmatprep.subr.bf16.mxu0 0
    %516 = vmatpush1.bf16.msra.mxu0 %v482
    %517 = vmatprep.subr.bf16.mxu0 0
    %518 = vmatpush1.bf16.msra.mxu0 %v483
    %519 = vmatprep.subr.bf16.mxu0 0
    %520 = vmatpush1.bf16.msra.mxu0 %v484
    %521 = vmatprep.subr.bf16.mxu0 0
    %522 = vmatpush1.bf16.msra.mxu0 %v485
    %523 = vmatprep.subr.bf16.mxu0 0
    %524 = vmatpush1.bf16.msra.mxu0 %v486
    %525 = vmatprep.subr.bf16.mxu0 0
    %526 = vmatpush1.bf16.msra.mxu0 %v487
    %527 = vmatprep.subr.bf16.mxu0 0
    %528 = vmatpush1.bf16.msra.mxu0 %v488
    %529 = vmatprep.subr.bf16.mxu0 0
    %530 = vmatpush1.bf16.msra.mxu0 %v489
    %531 = vmatprep.subr.bf16.mxu0 0
    %532 = vmatpush1.bf16.msra.mxu0 %v490
    %533 = vmatprep.subr.bf16.mxu0 0
    %534 = vmatpush1.bf16.msra.mxu0 %v491
    %535 = vmatprep.subr.bf16.mxu0 0
    %536 = vmatpush1.bf16.msra.mxu0 %v492
    %537 = vmatprep.subr.bf16.mxu0 0
    %538 = vmatpush1.bf16.msra.mxu0 %v493
    %539 = vmatprep.subr.bf16.mxu0 0
    %540 = vmatpush1.bf16.msra.mxu0 %v494
    %541 = vmatprep.subr.bf16.mxu0 0
    %542 = vmatpush1.bf16.msra.mxu0 %v495
    %543 = vmatprep.subr.bf16.mxu0 0
    %544 = vmatpush1.bf16.msra.mxu0 %v496
    %545 = vmatprep.mubr.bf16.mxu0 %v377
    %546 = vmatmul.mubr.bf16.gmra.mrb[0].mxu0 %v376
    %v547 = vpop.f32.mrb[0].mxu0
    %v548 = vadd.f32 %v415, %v547
    %v549 = vpop.f32.mrb[0].mxu0
    %v550 = vpop.f32.mrb[0].mxu0
    %v551 = vpop.f32.mrb[0].mxu0
    %552 = vdwg.mxu0
    %v553 = vmax.f32 %v548, 0.0
    %v554 = vpack.c.bf16 %v553, %v553
    %v555 = vld [vmem:[#allocation8] sm:$0xf]
    %v556 = vld [vmem:[#allocation8 + $0x4] sm:$0xf]
    %v557 = vld [vmem:[#allocation8 + $0x8] sm:$0xf]
    %v558 = vld [vmem:[#allocation8 + $0xc] sm:$0xf]
    %v559 = vld [vmem:[#allocation8 + $0x10] sm:$0xf]
    %v560 = vld [vmem:[#allocation8 + $0x14] sm:$0xf]
    %v561 = vld [vmem:[#allocation8 + $0x18] sm:$0xf]
    %v562 = vld [vmem:[#allocation8 + $0x1c] sm:$0xf]
    %v563 = vld [vmem:[#allocation8 + $0x20] sm:$0xf]
    %v564 = vld [vmem:[#allocation8 + $0x24] sm:$0xf]
    %v565 = vld [vmem:[#allocation8 + $0x28] sm:$0xf]
    %v566 = vld [vmem:[#allocation8 + $0x2c] sm:$0xf]
    %v567 = vld [vmem:[#allocation8 + $0x30] sm:$0xf]
    %v568 = vld [vmem:[#allocation8 + $0x34] sm:$0xf]
    %v569 = vld [vmem:[#allocation8 + $0x38] sm:$0xf]
    %v570 = vld [vmem:[#allocation8 + $0x3c] sm:$0xf]
    %v571 = vld [vmem:[%s7] sm:$0x1]
    %v573 = vlaneseq
    %v574 = vshrl.u32 %v573, 7
    %v575 = vsub.s32 0, %v574
    %v576 = vrot.slane %v571, %v575
    %v594 = vunpack.c.l.b16 %v555
    %v595 = vunpack.c.l.b16 %v556
    %v596 = vunpack.c.l.b16 %v557
    %v597 = vunpack.c.l.b16 %v558
    %v598 = vunpack.c.l.b16 %v559
    %v599 = vunpack.c.l.b16 %v560
    %v600 = vunpack.c.l.b16 %v561
    %v601 = vunpack.c.l.b16 %v562
    %v602 = vunpack.c.l.b16 %v563
    %v603 = vunpack.c.l.b16 %v564
    %v604 = vunpack.c.l.b16 %v565
    %v605 = vunpack.c.l.b16 %v566
    %v606 = vunpack.c.l.b16 %v567
    %v607 = vunpack.c.l.b16 %v568
    %v608 = vunpack.c.l.b16 %v569
    %v609 = vunpack.c.l.b16 %v570
    %v610 = vpack.c.b16 %v595, %v594
    %v611 = vpack.c.b16 %v597, %v596
    %v612 = vpack.c.b16 %v599, %v598
    %v613 = vpack.c.b16 %v601, %v600
    %v614 = vpack.c.b16 %v603, %v602
    %v615 = vpack.c.b16 %v605, %v604
    %v616 = vpack.c.b16 %v607, %v606
    %v617 = vpack.c.b16 %v609, %v608
    %626 = vmatprep.subr.bf16.mxu0 0
    %627 = vmatpush1.bf16.msra.mxu0 %v610
    %628 = vmatprep.subr.bf16.mxu0 0
    %629 = vmatpush1.bf16.msra.mxu0 %v611
    %630 = vmatprep.subr.bf16.mxu0 0
    %631 = vmatpush1.bf16.msra.mxu0 %v612
    %632 = vmatprep.subr.bf16.mxu0 0
    %633 = vmatpush1.bf16.msra.mxu0 %v613
    %634 = vmatprep.subr.bf16.mxu0 0
    %635 = vmatpush1.bf16.msra.mxu0 %v614
    %636 = vmatprep.subr.bf16.mxu0 0
    %637 = vmatpush1.bf16.msra.mxu0 %v615
    %638 = vmatprep.subr.bf16.mxu0 0
    %639 = vmatpush1.bf16.msra.mxu0 %v616
    %640 = vmatprep.subr.bf16.mxu0 0
    %641 = vmatpush1.bf16.msra.mxu0 %v617
    %642 = vmatprep.subr.bf16.mxu0 0
    %643 = vmatpush1.bf16.msra.mxu0 0
    %644 = vmatprep.subr.bf16.mxu0 0
    %645 = vmatpush1.bf16.msra.mxu0 0
    %646 = vmatprep.subr.bf16.mxu0 0
    %647 = vmatpush1.bf16.msra.mxu0 0
    %648 = vmatprep.subr.bf16.mxu0 0
    %649 = vmatpush1.bf16.msra.mxu0 0
    %650 = vmatprep.subr.bf16.mxu0 0
    %651 = vmatpush1.bf16.msra.mxu0 0
    %652 = vmatprep.subr.bf16.mxu0 0
    %653 = vmatpush1.bf16.msra.mxu0 0
    %654 = vmatprep.subr.bf16.mxu0 0
    %655 = vmatpush1.bf16.msra.mxu0 0
    %656 = vmatprep.subr.bf16.mxu0 0
    %657 = vmatpush1.bf16.msra.mxu0 0
    %658 = vmatprep.mubr.bf16.mxu0 0
    %659 = vmatmul.mubr.bf16.gmra.mrb[0].mxu0 %v554
    %v660 = vpop.f32.mrb[0].mxu0
    %v661 = vadd.f32 %v576, %v660
    %v662 = vpop.f32.mrb[0].mxu0
    %v663 = vpop.f32.mrb[0].mxu0
    %v664 = vpop.f32.mrb[0].mxu0
    %665 = vdwg.mxu0
    %v666 = vtanh.pop %v661
    %667 = vst [vmem:[#allocation17] sm:$0xff] %v666
    %v668 = vpack.c.bf16 %v666, %v666
    %v669 = vld [vmem:[#allocation10] sm:$0xf]
    %v670 = vld [vmem:[#allocation10 + $0x4] sm:$0xf]
    %v671 = vld [vmem:[#allocation10 + $0x8] sm:$0xf]
    %v672 = vld [vmem:[#allocation10 + $0xc] sm:$0xf]
    %v673 = vld [vmem:[#allocation10 + $0x10] sm:$0xf]
    %v674 = vld [vmem:[#allocation10 + $0x14] sm:$0xf]
    %v675 = vld [vmem:[#allocation10 + $0x18] sm:$0xf]
    %v676 = vld [vmem:[#allocation10 + $0x1c] sm:$0xf]
    %v677 = vld [vmem:[#allocation10 + $0x20] sm:$0xf]
    %v678 = vld [vmem:[#allocation10 + $0x24] sm:$0xf]
    %v679 = vld [vmem:[#allocation10 + $0x28] sm:$0xf]
    %v680 = vld [vmem:[#allocation10 + $0x2c] sm:$0xf]
    %v681 = vld [vmem:[#allocation10 + $0x30] sm:$0xf]
    %v682 = vld [vmem:[#allocation10 + $0x34] sm:$0xf]
    %v683 = vld [vmem:[#allocation10 + $0x38] sm:$0xf]
    %v684 = vld [vmem:[#allocation10 + $0x3c] sm:$0xf]
    %v701 = vunpack.c.l.b16 %v669
    %v702 = vunpack.c.l.b16 %v670
    %v703 = vunpack.c.l.b16 %v671
    %v704 = vunpack.c.l.b16 %v672
    %v705 = vunpack.c.l.b16 %v673
    %v706 = vunpack.c.l.b16 %v674
    %v707 = vunpack.c.l.b16 %v675
    %v708 = vunpack.c.l.b16 %v676
    %v709 = vunpack.c.l.b16 %v677
    %v710 = vunpack.c.l.b16 %v678
    %v711 = vunpack.c.l.b16 %v679
    %v712 = vunpack.c.l.b16 %v680
    %v713 = vunpack.c.l.b16 %v681
    %v714 = vunpack.c.l.b16 %v682
    %v715 = vunpack.c.l.b16 %v683
    %v716 = vunpack.c.l.b16 %v684
    %v717 = vpack.c.b16 %v702, %v701
    %v718 = vpack.c.b16 %v704, %v703
    %v719 = vpack.c.b16 %v706, %v705
    %v720 = vpack.c.b16 %v708, %v707
    %v721 = vpack.c.b16 %v710, %v709
    %v722 = vpack.c.b16 %v712, %v711
    %v723 = vpack.c.b16 %v714, %v713
    %v724 = vpack.c.b16 %v716, %v715
    %733 = vmatprep.subr.bf16.mxu0 0
    %734 = vmatpush1.bf16.msra.mxu0 %v717
    %735 = vmatprep.subr.bf16.mxu0 0
    %736 = vmatpush1.bf16.msra.mxu0 %v718
    %737 = vmatprep.subr.bf16.mxu0 0
    %738 = vmatpush1.bf16.msra.mxu0 %v719
    %739 = vmatprep.subr.bf16.mxu0 0
    %740 = vmatpush1.bf16.msra.mxu0 %v720
    %741 = vmatprep.subr.bf16.mxu0 0
    %742 = vmatpush1.bf16.msra.mxu0 %v721
    %743 = vmatprep.subr.bf16.mxu0 0
    %744 = vmatpush1.bf16.msra.mxu0 %v722
    %745 = vmatprep.subr.bf16.mxu0 0
    %746 = vmatpush1.bf16.msra.mxu0 %v723
    %747 = vmatprep.subr.bf16.mxu0 0
    %748 = vmatpush1.bf16.msra.mxu0 %v724
    %749 = vmatprep.subr.bf16.mxu0 0
    %750 = vmatpush1.bf16.msra.mxu0 0
    %751 = vmatprep.subr.bf16.mxu0 0
    %752 = vmatpush1.bf16.msra.mxu0 0
    %753 = vmatprep.subr.bf16.mxu0 0
    %754 = vmatpush1.bf16.msra.mxu0 0
    %755 = vmatprep.subr.bf16.mxu0 0
    %756 = vmatpush1.bf16.msra.mxu0 0
    %757 = vmatprep.subr.bf16.mxu0 0
    %758 = vmatpush1.bf16.msra.mxu0 0
    %759 = vmatprep.subr.bf16.mxu0 0
    %760 = vmatpush1.bf16.msra.mxu0 0
    %761 = vmatprep.subr.bf16.mxu0 0
    %762 = vmatpush1.bf16.msra.mxu0 0
    %763 = vmatprep.subr.bf16.mxu0 0
    %764 = vmatpush1.bf16.msra.mxu0 0
    %765 = vmatprep.mubr.bf16.mxu0 0
    %766 = vmatmul.mubr.bf16.gmra.mrb[0].mxu0 %v668
    %v767 = vpop.f32.mrb[0].mxu0
    %v768 = vadd.f32 0.0, %v767
    %v769 = vpop.f32.mrb[0].mxu0
    %v770 = vpop.f32.mrb[0].mxu0
    %v771 = vpop.f32.mrb[0].mxu0
    %772 = vdwg.mxu0
    %v773 = vrot.slane %v768, 4
    %v774 = vadd.f32 %v768, %v773
    %v775 = vrot.slane %v774, 2
    %v776 = vadd.f32 %v774, %v775
    %v777 = vrot.slane %v776, 1
    %v778 = vadd.f32 %v776, %v777
    %v779 = vmul.f32 %v768, %v768
    %v780 = vrot.slane %v779, 4
    %v781 = vadd.f32 %v779, %v780
    %v782 = vrot.slane %v781, 2
    %v783 = vadd.f32 %v781, %v782
    %v784 = vrot.slane %v783, 1
    %v785 = vadd.f32 %v783, %v784
    %v786 = vld [vmem:[%s9] sm:$0x1]
    %v787 = vld [vmem:[%s10] sm:$0x1]
    %v788 = vmul.f32 %v778, 0.125
    %v789 = vmul.f32 %v785, 0.125
    %v790 = vmul.f32 %v788, %v788
    %v791 = vsub.f32 %v789, %v790
    %v792 = vmax.f32 %v791, 0.0
    %v793 = vadd.f32 %v792, 1e-05
    %v794 = vrsqrt.pop %v793
    %v795 = vmul.f32 %v786, %v794
    %v796 = vmul.f32 %v788, %v795
    %v797 = vsub.f32 %v787, %v796
    %v799 = vlaneseq
    %v800 = vshrl.u32 %v799, 7
    %v801 = vsub.s32 0, %v800
    %v802 = vrot.slane %v795, %v801
    %v804 = vmul.f32 %v768, %v802
    %v806 = vlaneseq
    %v807 = vshrl.u32 %v806, 7
    %v808 = vsub.s32 0, %v807
    %v809 = vrot.slane %v797, %v808
    %v811 = vadd.f32 %v804, %v809
    %v812 = vmax.f32 %v811, 0.0
    %v813 = vpack.c.bf16 %v812, %v812
    %v814 = vld [vmem:[#allocation11] sm:$0xff]
    %v815 = vld [vmem:[#allocation11 + $0x8] sm:$0xff]
    %v816 = vld [vmem:[#allocation11 + $0x10] sm:$0xff]
    %v817 = vld [vmem:[#allocation11 + $0x18] sm:$0xff]
    %v818 = vld [vmem:[#allocation11 + $0x20] sm:$0xff]
    %v819 = vld [vmem:[#allocation11 + $0x28] sm:$0xff]
    %v820 = vld [vmem:[#allocation11 + $0x30] sm:$0xff]
    %v821 = vld [vmem:[#allocation11 + $0x38] sm:$0xff]
    %v822 = vld [vmem:[#allocation11 + $0x40] sm:$0xff]
    %v823 = vld [vmem:[#allocation11 + $0x48] sm:$0xff]
    %v824 = vld [vmem:[#allocation11 + $0x50] sm:$0xff]
    %v825 = vld [vmem:[#allocation11 + $0x58] sm:$0xff]
    %v826 = vld [vmem:[#allocation11 + $0x60] sm:$0xff]
    %v827 = vld [vmem:[#allocation11 + $0x68] sm:$0xff]
    %v828 = vld [vmem:[#allocation11 + $0x70] sm:$0xff]
    %v829 = vld [vmem:[#allocation11 + $0x78] sm:$0xff]
    %v830 = vld [vmem:[#allocation13] sm:$0x3]
    %v832 = vlaneseq
    %v833 = vshrl.u32 %v832, 7
    %v834 = vsub.s32 0, %v833
    %v835 = vrot.slane %v830, %v834
    %v836 = vlaneseq
    %v837 = vshrl.u32 %v836, 7
    %v838 = vsub.s32 1, %v837
    %v839 = vrot.slane %v830, %v838
    %v858 = vunpack.c.l.b16 %v814
    %v859 = vunpack.c.h.b16 %v814
    %v860 = vunpack.c.l.b16 %v815
    %v861 = vunpack.c.h.b16 %v815
    %v862 = vunpack.c.l.b16 %v816
    %v863 = vunpack.c.h.b16 %v816
    %v864 = vunpack.c.l.b16 %v817
    %v865 = vunpack.c.h.b16 %v817
    %v866 = vunpack.c.l.b16 %v818
    %v867 = vunpack.c.h.b16 %v818
    %v868 = vunpack.c.l.b16 %v819
    %v869 = vunpack.c.h.b16 %v819
    %v870 = vunpack.c.l.b16 %v820
    %v871 = vunpack.c.h.b16 %v820
    %v872 = vunpack.c.l.b16 %v821
    %v873 = vunpack.c.h.b16 %v821
    %v874 = vunpack.c.l.b16 %v822
    %v875 = vunpack.c.h.b16 %v822
    %v876 = vunpack.c.l.b16 %v823
    %v877 = vunpack.c.h.b16 %v823
    %v878 = vunpack.c.l.b16 %v824
    %v879 = vunpack.c.h.b16 %v824
    %v880 = vunpack.c.l.b16 %v825
    %v881 = vunpack.c.h.b16 %v825
    %v882 = vunpack.c.l.b16 %v826
    %v883 = vunpack.c.h.b16 %v826
    %v884 = vunpack.c.l.b16 %v827
    %v885 = vunpack.c.h.b16 %v827
    %v886 = vunpack.c.l.b16 %v828
    %v887 = vunpack.c.h.b16 %v828
    %v888 = vunpack.c.l.b16 %v829
    %v889 = vunpack.c.h.b16 %v829
    %v890 = vpack.c.b16 %v860, %v858
    %v891 = vpack.c.b16 %v861, %v859
    %v892 = vpack.c.b16 %v864, %v862
    %v893 = vpack.c.b16 %v865, %v863
    %v894 = vpack.c.b16 %v868, %v866
    %v895 = vpack.c.b16 %v869, %v867
    %v896 = vpack.c.b16 %v872, %v870
    %v897 = vpack.c.b16 %v873, %v871
    %v898 = vpack.c.b16 %v876, %v874
    %v899 = vpack.c.b16 %v877, %v875
    %v900 = vpack.c.b16 %v880, %v878
    %v901 = vpack.c.b16 %v881, %v879
    %v902 = vpack.c.b16 %v884, %v882
    %v903 = vpack.c.b16 %v885, %v883
    %v904 = vpack.c.b16 %v888, %v886
    %v905 = vpack.c.b16 %v889, %v887
    %922 = vmatprep.subr.bf16.mxu0 %v891
    %923 = vmatpush1.bf16.msra.mxu0 %v890
    %924 = vmatprep.subr.bf16.mxu0 %v893
    %925 = vmatpush1.bf16.msra.mxu0 %v892
    %926 = vmatprep.subr.bf16.mxu0 %v895
    %927 = vmatpush1.bf16.msra.mxu0 %v894
    %928 = vmatprep.subr.bf16.mxu0 %v897
    %929 = vmatpush1.bf16.msra.mxu0 %v896
    %930 = vmatprep.subr.bf16.mxu0 %v899
    %931 = vmatpush1.bf16.msra.mxu0 %v898
    %932 = vmatprep.subr.bf16.mxu0 %v901
    %933 = vmatpush1.bf16.msra.mxu0 %v900
    %934 = vmatprep.subr.bf16.mxu0 %v903
    %935 = vmatpush1.bf16.msra.mxu0 %v902
    %936 = vmatprep.subr.bf16.mxu0 %v905
    %937 = vmatpush1.bf16.msra.mxu0 %v904
    %938 = vmatprep.subr.bf16.mxu0 0
    %939 = vmatpush1.bf16.msra.mxu0 0
    %940 = vmatprep.subr.bf16.mxu0 0
    %941 = vmatpush1.bf16.msra.mxu0 0
    %942 = vmatprep.subr.bf16.mxu0 0
    %943 = vmatpush1.bf16.msra.mxu0 0
    %944 = vmatprep.subr.bf16.mxu0 0
    %945 = vmatpush1.bf16.msra.mxu0 0
    %946 = vmatprep.subr.bf16.mxu0 0
    %947 = vmatpush1.bf16.msra.mxu0 0
    %948 = vmatprep.subr.bf16.mxu0 0
    %949 = vmatpush1.bf16.msra.mxu0 0
    %950 = vmatprep.subr.bf16.mxu0 0
    %951 = vmatpush1.bf16.msra.mxu0 0
    %952 = vmatprep.subr.bf16.mxu0 0
    %953 = vmatpush1.bf16.msra.mxu0 0
    %954 = vmatprep.mubr.bf16.mxu0 0
    %955 = vmatmul.mubr.bf16.gmra.mrb[0].mxu0 %v813
    %v956 = vpop.f32.mrb[0].mxu0
    %v957 = vadd.f32 %v835, %v956
    %v958 = vpop.f32.mrb[0].mxu0
    %v959 = vadd.f32 %v839, %v958
    %v960 = vpop.f32.mrb[0].mxu0
    %v961 = vpop.f32.mrb[0].mxu0
    %962 = vdwg.mxu0
    %v963 = vmax.f32 %v957, 0.0
    %v964 = vmax.f32 %v959, 0.0
    %v965 = vpack.c.bf16 %v963, %v963
    %v966 = vpack.c.bf16 %v964, %v964
    %v967 = vld [vmem:[#allocation14] sm:$0xf]
    %v968 = vld [vmem:[#allocation14 + $0x4] sm:$0xf]
    %v969 = vld [vmem:[#allocation14 + $0x8] sm:$0xf]
    %v970 = vld [vmem:[#allocation14 + $0xc] sm:$0xf]
    %v971 = vld [vmem:[#allocation14 + $0x10] sm:$0xf]
    %v972 = vld [vmem:[#allocation14 + $0x14] sm:$0xf]
    %v973 = vld [vmem:[#allocation14 + $0x18] sm:$0xf]
    %v974 = vld [vmem:[#allocation14 + $0x1c] sm:$0xf]
    %v975 = vld [vmem:[#allocation14 + $0x20] sm:$0xf]
    %v976 = vld [vmem:[#allocation14 + $0x24] sm:$0xf]
    %v977 = vld [vmem:[#allocation14 + $0x28] sm:$0xf]
    %v978 = vld [vmem:[#allocation14 + $0x2c] sm:$0xf]
    %v979 = vld [vmem:[#allocation14 + $0x30] sm:$0xf]
    %v980 = vld [vmem:[#allocation14 + $0x34] sm:$0xf]
    %v981 = vld [vmem:[#allocation14 + $0x38] sm:$0xf]
    %v982 = vld [vmem:[#allocation14 + $0x3c] sm:$0xf]
    %v983 = vld [vmem:[#allocation14 + $0x40] sm:$0xf]
    %v984 = vld [vmem:[#allocation14 + $0x44] sm:$0xf]
    %v985 = vld [vmem:[#allocation14 + $0x48] sm:$0xf]
    %v986 = vld [vmem:[#allocation14 + $0x4c] sm:$0xf]
    %v987 = vld [vmem:[#allocation14 + $0x50] sm:$0xf]
    %v988 = vld [vmem:[#allocation14 + $0x54] sm:$0xf]
    %v989 = vld [vmem:[#allocation14 + $0x58] sm:$0xf]
    %v990 = vld [vmem:[#allocation14 + $0x5c] sm:$0xf]
    %v991 = vld [vmem:[#allocation14 + $0x60] sm:$0xf]
    %v992 = vld [vmem:[#allocation14 + $0x64] sm:$0xf]
    %v993 = vld [vmem:[#allocation14 + $0x68] sm:$0xf]
    %v994 = vld [vmem:[#allocation14 + $0x6c] sm:$0xf]
    %v995 = vld [vmem:[#allocation14 + $0x70] sm:$0xf]
    %v996 = vld [vmem:[#allocation14 + $0x74] sm:$0xf]
    %v997 = vld [vmem:[#allocation14 + $0x78] sm:$0xf]
    %v998 = vld [vmem:[#allocation14 + $0x7c] sm:$0xf]
    %v999 = vld [vmem:[#allocation16] sm:$0x1]
    %v1001 = vlaneseq
    %v1002 = vshrl.u32 %v1001, 7
    %v1003 = vsub.s32 0, %v1002
    %v1004 = vrot.slane %v999, %v1003
    %v1038 = vunpack.c.l.b16 %v967
    %v1039 = vunpack.c.l.b16 %v968
    %v1040 = vunpack.c.l.b16 %v969
    %v1041 = vunpack.c.l.b16 %v970
    %v1042 = vunpack.c.l.b16 %v971
    %v1043 = vunpack.c.l.b16 %v972
    %v1044 = vunpack.c.l.b16 %v973
    %v1045 = vunpack.c.l.b16 %v974
    %v1046 = vunpack.c.l.b16 %v975
    %v1047 = vunpack.c.l.b16 %v976
    %v1048 = vunpack.c.l.b16 %v977
    %v1049 = vunpack.c.l.b16 %v978
    %v1050 = vunpack.c.l.b16 %v979
    %v1051 = vunpack.c.l.b16 %v980
    %v1052 = vunpack.c.l.b16 %v981
    %v1053 = vunpack.c.l.b16 %v982
    %v1054 = vunpack.c.l.b16 %v983
    %v1055 = vunpack.c.l.b16 %v984
    %v1056 = vunpack.c.l.b16 %v985
    %v1057 = vunpack.c.l.b16 %v986
    %v1058 = vunpack.c.l.b16 %v987
    %v1059 = vunpack.c.l.b16 %v988
    %v1060 = vunpack.c.l.b16 %v989
    %v1061 = vunpack.c.l.b16 %v990
    %v1062 = vunpack.c.l.b16 %v991
    %v1063 = vunpack.c.l.b16 %v992
    %v1064 = vunpack.c.l.b16 %v993
    %v1065 = vunpack.c.l.b16 %v994
    %v1066 = vunpack.c.l.b16 %v995
    %v1067 = vunpack.c.l.b16 %v996
    %v1068 = vunpack.c.l.b16 %v997
    %v1069 = vunpack.c.l.b16 %v998
    %v1070 = vpack.c.b16 %v1039, %v1038
    %v1071 = vpack.c.b16 %v1041, %v1040
    %v1072 = vpack.c.b16 %v1043, %v1042
    %v1073 = vpack.c.b16 %v1045, %v1044
    %v1074 = vpack.c.b16 %v1047, %v1046
    %v1075 = vpack.c.b16 %v1049, %v1048
    %v1076 = vpack.c.b16 %v1051, %v1050
    %v1077 = vpack.c.b16 %v1053, %v1052
    %v1078 = vpack.c.b16 %v1055, %v1054
    %v1079 = vpack.c.b16 %v1057, %v1056
    %v1080 = vpack.c.b16 %v1059, %v1058
    %v1081 = vpack.c.b16 %v1061, %v1060
    %v1082 = vpack.c.b16 %v1063, %v1062
    %v1083 = vpack.c.b16 %v1065, %v1064
    %v1084 = vpack.c.b16 %v1067, %v1066
    %v1085 = vpack.c.b16 %v1069, %v1068
    %1102 = vmatprep.subr.bf16.mxu0 0
    %1103 = vmatpush1.bf16.msra.mxu0 %v1070
    %1104 = vmatprep.subr.bf16.mxu0 0
    %1105 = vmatpush1.bf16.msra.mxu0 %v1071
    %1106 = vmatprep.subr.bf16.mxu0 0
    %1107 = vmatpush1.bf16.msra.mxu0 %v1072
    %1108 = vmatprep.subr.bf16.mxu0 0
    %1109 = vmatpush1.bf16.msra.mxu0 %v1073
    %1110 = vmatprep.subr.bf16.mxu0 0
    %1111 = vmatpush1.bf16.msra.mxu0 %v1074
    %1112 = vmatprep.subr.bf16.mxu0 0
    %1113 = vmatpush1.bf16.msra.mxu0 %v1075
    %1114 = vmatprep.subr.bf16.mxu0 0
    %1115 = vmatpush1.bf16.msra.mxu0 %v1076
    %1116 = vmatprep.subr.bf16.mxu0 0
    %1117 = vmatpush1.bf16.msra.mxu0 %v1077
    %1118 = vmatprep.subr.bf16.mxu0 0
    %1119 = vmatpush1.bf16.msra.mxu0 %v1078
    %1120 = vmatprep.subr.bf16.mxu0 0
    %1121 = vmatpush1.bf16.msra.mxu0 %v1079
    %1122 = vmatprep.subr.bf16.mxu0 0
    %1123 = vmatpush1.bf16.msra.mxu0 %v1080
    %1124 = vmatprep.subr.bf16.mxu0 0
    %1125 = vmatpush1.bf16.msra.mxu0 %v1081
    %1126 = vmatprep.subr.bf16.mxu0 0
    %1127 = vmatpush1.bf16.msra.mxu0 %v1082
    %1128 = vmatprep.subr.bf16.mxu0 0
    %1129 = vmatpush1.bf16.msra.mxu0 %v1083
    %1130 = vmatprep.subr.bf16.mxu0 0
    %1131 = vmatpush1.bf16.msra.mxu0 %v1084
    %1132 = vmatprep.subr.bf16.mxu0 0
    %1133 = vmatpush1.bf16.msra.mxu0 %v1085
    %1134 = vmatprep.mubr.bf16.mxu0 %v966
    %1135 = vmatmul.mubr.bf16.gmra.mrb[0].mxu0 %v965
    %v1136 = vpop.f32.mrb[0].mxu0
    %v1137 = vadd.f32 %v1004, %v1136
    %v1138 = vpop.f32.mrb[0].mxu0
    %v1139 = vpop.f32.mrb[0].mxu0
    %v1140 = vpop.f32.mrb[0].mxu0
    %1141 = vdwg.mxu0
    %1142 = vst [vmem:[#allocation18] sm:$0xff] %v1137
    // Predicated region
    $region98: #{mlpae_forward.1} parent=1 // pred_check
      _
    $region99: #{mlpae_forward.1} parent=1 // pred_check_branch
      %1144 = sbr.rel (0) target = $region101
    $region100: #{mlpae_forward.1} parent=1 // pred_region
      %s1146 = ssub.s32 128, 128
      %1147 = vsyncadd [#allocation4], %s1146
      %s1149 = sshll.u32 [#allocation17], 4
      %s1150 = int_to_ptr.vmem [resolvable:$true] %s1149
      %1152 = dma.vmem_to_hbm [thread:$0]  %s1150, 128, %s15, [#allocation4]
    $region101: #{mlpae_forward.1} parent=1 // pred_fallthru
      _
    // Predicated region
    $region102: #{mlpae_forward.1} parent=1 // pred_check
      _
    $region103: #{mlpae_forward.1} parent=1 // pred_check_branch
      %1154 = sbr.rel (0) target = $region105
    $region104: #{mlpae_forward.1} parent=1 // pred_region
      %s1156 = ssub.s32 128, 128
      %1157 = vsyncadd [#allocation19], %s1156
      %s1159 = sshll.u32 [#allocation18], 4
      %s1160 = int_to_ptr.vmem [resolvable:$true] %s1159
      %1162 = dma.vmem_to_hbm [thread:$0]  %s1160, 128, %s16, [#allocation19]
    $region105: #{mlpae_forward.1} parent=1 // pred_fallthru
      _
    // Predicated region
    $region106: #{mlpae_forward.1} parent=1 // pred_check
      _
    $region107: #{mlpae_forward.1} parent=1 // pred_check_branch
      %1164 = sbr.rel (0) target = $region109
    $region108: #{mlpae_forward.1} parent=1 // pred_region
      %1165 = dma.done [#allocation4], 128
    $region109: #{mlpae_forward.1} parent=1 // pred_fallthru
      _
    // Predicated region
    $region110: #{mlpae_forward.1} parent=1 // pred_check
      _
    $region111: #{mlpae_forward.1} parent=1 // pred_check_branch
      %1167 = sbr.rel (0) target = $region113
    $region112: #{mlpae_forward.1} parent=1 // pred_region
      %1168 = dma.done [#allocation19], 128
    $region113: #{mlpae_forward.1} parent=1 // pred_fallthru
      _
    %1169 = vsyncpa [#allocation3], 1
    %1170 = vsyncpa [#allocation6], 1
    %1171 = vsyncpa [#allocation9], 1
    %1172 = vsyncpa [#allocation12], 1
    %1173 = vsyncpa [#allocation15], 1
    %1174 = vsyncpa [#allocation4], 1
    %1175 = vsyncpa [#allocation19], 1

</llo_original>
